<compile_context>
chip_gen: v6e
topology: v6e:2x2x1
jax: 0.10.0
libtpu: 0.0.40
codegen_flags: <defaults>
</compile_context>

<pallas_src>
import functools

import numpy as np
import jax
import jax.numpy as jnp
from jax import lax
from jax.experimental import pallas as pl
from jax.experimental.pallas import tpu as pltpu


# ---------------- deterministic kernel construction (mirrors the PyTorch module) ------------
def _sobel_kernel_3x3() -> np.ndarray:
    return np.array([[-1.0, 0.0, 1.0],
                     [-2.0, 0.0, 2.0],
                     [-1.0, 0.0, 1.0]], dtype=np.float32)


def _diff_kernel_3x3() -> np.ndarray:
    return np.array([[0.0, 0.0, 0.0],
                     [-1.0, 0.0, 1.0],
                     [0.0, 0.0, 0.0]], dtype=np.float32)


def _sobel_kernel_5x5_2nd_order() -> np.ndarray:
    return np.array([[-1., 0., 2., 0., -1.],
                     [-4., 0., 8., 0., -4.],
                     [-6., 0., 12., 0., -6.],
                     [-4., 0., 8., 0., -4.],
                     [-1., 0., 2., 0., -1.]], dtype=np.float32)


def _sobel_kernel_5x5_2nd_order_xy() -> np.ndarray:
    return np.array([[-1., -2., 0., 2., 1.],
                     [-2., -4., 0., 4., 2.],
                     [0., 0., 0., 0., 0.],
                     [2., 4., 0., -4., -2.],
                     [1., 2., 0., -2., -1.]], dtype=np.float32)


def get_spatial_gradient_kernel2d(mode: str, order: int) -> np.ndarray:
    if mode == "sobel" and order == 1:
        kx = _sobel_kernel_3x3()
        return np.stack([kx, kx.T])
    if mode == "diff" and order == 1:
        kx = _diff_kernel_3x3()
        return np.stack([kx, kx.T])
    if mode == "sobel" and order == 2:
        gxx = _sobel_kernel_5x5_2nd_order()
        return np.stack([gxx, _sobel_kernel_5x5_2nd_order_xy(), gxx.T])
    raise NotImplementedError(f"mode={mode}, order={order}")


def get_separable_taps(mode: str, order: int):
    """1-D separable factors: dense kernel[k] == outer(v[k], h[k])."""
    if mode == "sobel" and order == 1:
        v = ((1.0, 2.0, 1.0), (-1.0, 0.0, 1.0))
        h = ((-1.0, 0.0, 1.0), (1.0, 2.0, 1.0))
    elif mode == "diff" and order == 1:
        v = ((0.0, 1.0, 0.0), (-1.0, 0.0, 1.0))
        h = ((-1.0, 0.0, 1.0), (0.0, 1.0, 0.0))
    elif mode == "sobel" and order == 2:
        v = ((1.0, 4.0, 6.0, 4.0, 1.0),
             (-1.0, -2.0, 0.0, 2.0, 1.0),
             (-1.0, 0.0, 2.0, 0.0, -1.0))
        h = ((-1.0, 0.0, 2.0, 0.0, -1.0),
             (1.0, 2.0, 0.0, -2.0, -1.0),
             (1.0, 4.0, 6.0, 4.0, 1.0))
    else:
        raise NotImplementedError(f"mode={mode}, order={order}")
    return v, h


# ---------------- tiling selection ----------------------------------------------------------
def _divisors(n: int):
    ds, i = set(), 1
    while i * i <= n:
        if n % i == 0:
            ds.add(i)
            ds.add(n // i)
        i += 1
    return sorted(ds)


def _temp_arrays(max_r: int) -> int:
    # Rough upper bound on live (Nb, TL) f32 temporaries in the kernel body:
    # x + vcache(2r) + t + hcache(2r) + accumulator + iota/masks/transients.
    return 8 + 4 * max_r


def _select_tiling(N, H, W, K, itemsize, max_r, budget, h_tile=None):
    """Pick (Nb images per block, Ht rows per block, h_tiled?) under a VMEM budget.

    Constraints honoured:
      * Nb divides N and is a multiple of the dtype's sublane packing (or Nb == N), so no
        remainder-pad pass over HBM is ever needed and blocks stay sublane-dense.
      * When H is tiled, Ht divides H, Ht*W is a multiple of 128 (lane-dense flattened tiles)
        and Ht >= the kernel radius (halo rows live in the immediately adjacent tile).
      * >= ~4 grid steps along N whenever N allows (pipelining / megacore), blocks otherwise
        as large as the budget permits.
    """
    sub = max(8, 32 // itemsize)            # 8 for f32, 16 for bf16, 32 for int8/fp8
    n_temps = _temp_arrays(max_r)

    def blk_bytes(nb, ht, tiled):
        io = itemsize * ((1 + K) + (2 if tiled else 0))   # in + out (+ prev/next halo tiles)
        return nb * ht * W * (2 * io + 4 * n_temps)       # x2: double-buffered blocks

    valid_nb = sorted({d for d in _divisors(N) if d % sub == 0} | {N})
    pipe_nb = max(sub, ((-(-N // 4)) + sub - 1) // sub * sub)   # ~N/4, rounded up to sublane

    if h_tile is not None:
        if not (H % h_tile == 0 and h_tile >= max_r
                and (h_tile == H or (h_tile * W) % 128 == 0)):
            raise ValueError(f"invalid h_tile={h_tile} for H={H}, W={W}")
        valid_ht = [h_tile]
    else:
        valid_ht = [H] + [d for d in reversed(_divisors(H))
                          if d < H and d >= max_r and (d * W) % 128 == 0]

    for ht in valid_ht:                     # prefer whole images, then the largest row tiles
        tiled = ht < H
        fits = [nb for nb in valid_nb if blk_bytes(nb, ht, tiled) <= budget]
        if fits:
            piped = [nb for nb in fits if nb <= pipe_nb]
            return (max(piped) if piped else min(fits)), ht, tiled

    # Nothing fits the budget: best effort with the smallest valid block.
    # TODO(synk): add a W-tiled / lane-padded path for single rows wider than the VMEM budget.
    ht = valid_ht[-1]
    return valid_nb[0], ht, ht < H


# ---------------- Pallas kernel -------------------------------------------------------------
def _spatial_gradient_kernel(W, v_taps, h_taps, scales, h_tiled,
                             col_ref, x_ref, *rest):
    # Refs:
    #   col_ref : (1, TL) int32  -- lane -> column-within-row map (host constant; avoids a
    #                               vector int modulo for non-power-of-two W)
    #   x_ref   : (Nb, TL)       -- Nb flattened row-tiles (TL = Ht*W lanes)
    #   [prev_ref, next_ref]     -- neighbouring row-tiles (only when h_tiled)
    #   o_ref   : (Nb, K, TL)    -- K gradient maps per image tile
    if h_tiled:
        prev_ref, next_ref, o_ref = rest
    else:
        (o_ref,) = rest

    nb, TL = x_ref.shape
    x = x_ref[...].astype(jnp.float32)                    # single cast, f32 accumulation
    if h_tiled:
        xp = prev_ref[...].astype(jnp.float32)            # tile above (clamped at top edge)
        xn = next_ref[...].astype(jnp.float32)            # tile below (clamped at bottom edge)
        is_first = pl.program_id(1) == 0
        is_last = pl.program_id(1) == pl.num_programs(1) - 1

    pos = lax.broadcasted_iota(jnp.int32, (1, TL), 1)     # flat pixel index within the tile
    col = col_ref[...]                                    # column within a row

    max_rv = max(len(v) // 2 for v in v_taps)
    max_rh = max(len(h) // 2 for h in h_taps)

    # Boundary masks, hoisted out of the per-map loop (shared by every output map).
    top_mask = {m: pos < m * W for m in range(1, max_rv + 1)}
    bot_mask = {m: pos >= TL - m * W for m in range(1, max_rv + 1)}
    left_mask = {m: col < m for m in range(1, max_rh + 1)}
    right_mask = {m: col >= W - m for m in range(1, max_rh + 1)}

    def lane_roll(a, shift):
        s = shift % TL                                    # static, always non-negative
        return a if s == 0 else pltpu.roll(a, s, axis=1)  # XLU rotate, jnp.roll semantics

    # Vertically shifted copies of x (value at row i+off), replicate-clamped at the image
    # border; shared across all K output maps.
    vcache = {0: x}

    def vshift(off):
        if off in vcache:
            return vcache[off]
        m = abs(off)
        clamped = vshift(off + 1) if off < 0 else vshift(off - 1)
        if off < 0:
            rolled = lane_roll(x, m * W)
            edge = jnp.where(is_first, clamped, lane_roll(xp, m * W)) if h_tiled else clamped
            val = jnp.where(top_mask[m], edge, rolled)
        else:
            rolled = lane_roll(x, -m * W)
            edge = jnp.where(is_last, clamped, lane_roll(xn, -m * W)) if h_tiled else clamped
            val = jnp.where(bot_mask[m], edge, rolled)
        vcache[off] = val
        return val

    # Horizontally shifted copies (value at column j+off), replicate-clamped at the row ends.
    def hshift(a, off, cache):
        if off in cache:
            return cache[off]
        m = abs(off)
        clamped = hshift(a, off + 1, cache) if off < 0 else hshift(a, off - 1, cache)
        if off < 0:
            val = jnp.where(left_mask[m], clamped, lane_roll(a, m))
        else:
            val = jnp.where(right_mask[m], clamped, lane_roll(a, -m))
        cache[off] = val
        return val

    # TODO(synk): for W >= 128 a (Nb, H, W) layout would turn the +-W vertical lane rolls into
    # sublane shifts, and a banded-matmul variant could use the idle MXU on v7x.
    for k, (v, h, sc) in enumerate(zip(v_taps, h_taps, scales)):
        rv, rh = len(v) // 2, len(h) // 2
        # vertical separable pass
        t = None
        for m, wgt in enumerate(v):
            wgt = float(wgt)
            if wgt == 0.0:
                continue
            term = vshift(m - rv)
            term = term if wgt == 1.0 else wgt * term
            t = term if t is None else t + term
        # horizontal separable pass (its own shift cache; the boundary masks are shared)
        hcache = {0: t}
        r = None
        for m, wgt in enumerate(h):
            wgt = float(wgt)
            if wgt == 0.0:
                continue
            term = hshift(t, m - rh, hcache)
            term = term if wgt == 1.0 else wgt * term
            r = term if r is None else r + term
        sc = float(sc)
        if sc != 1.0:
            r = r * sc
        o_ref[:, k, :] = r.astype(o_ref.dtype)


def spatial_gradient(x, mode: str = "sobel", order: int = 1, normalized: bool = True,
                     h_tile=None):
    """Matches kornia/PyTorch SpatialGradient.forward: (B, C, H, W) -> (B, C, K, H, W)."""
    B, C, H, W = x.shape
    k_dense = get_spatial_gradient_kernel2d(mode, order)          # (K, kh, kw)
    v_taps, h_taps = get_separable_taps(mode, order)
    # sanity: separable factors reproduce the dense module kernels exactly
    assert np.allclose(np.stack([np.outer(v, h) for v, h in zip(v_taps, h_taps)]), k_dense)
    K = k_dense.shape[0]
    if normalized:
        scales = tuple(float(1.0 / np.abs(kk).sum()) for kk in k_dense)
    else:
        scales = (1.0,) * K
    max_r = max(max(len(v) // 2 for v in v_taps), max(len(h) // 2 for h in h_taps))

    N, HW = B * C, H * W
    itemsize = jnp.dtype(x.dtype).itemsize

    # Per-generation VMEM budget (v5e/v6e: 128 MiB physical, v7x: 64 MiB).
    try:
        vmem_cap = int(getattr(pltpu.get_tpu_info(), "vmem_capacity_bytes", 64 << 20))
    except Exception:                                     # best-effort hardware query
        vmem_cap = 64 << 20
    budget = min(int(vmem_cap * 0.42), 48 << 20)          # ~48 MiB on 128 MiB parts, ~27 MiB on v7x

    Nb, Ht, h_tiled = _select_tiling(N, H, W, K, itemsize, max_r, budget, h_tile)
    num_n, num_h = N // Nb, H // Ht
    TL = Ht * W

    xf = x.reshape(N, HW)                                 # contiguous reshape, no HBM pad pass
    col_map = jnp.asarray(np.tile(np.arange(W, dtype=np.int32), Ht)[None, :])

    kern = functools.partial(_spatial_gradient_kernel, W, v_taps, h_taps, scales, h_tiled)

    # Honest VMEM accounting: double-buffered in/out blocks + live f32 temporaries + headroom.
    n_temps = _temp_arrays(max_r)
    io_elem = itemsize * ((1 + K) + (2 if h_tiled else 0))
    vmem_limit = 2 * Nb * TL * io_elem + Nb * TL * 4 * n_temps + 2 * TL * 4 + (2 << 20)
    vmem_limit = int(min(max(vmem_limit, 16 << 20), int(0.85 * vmem_cap)))

    nnz = sum(sum(1 for w_ in v if w_) + sum(1 for w_ in h if w_)
              for v, h in zip(v_taps, h_taps))
    cost = pl.CostEstimate(
        flops=int(2 * N * HW * nnz),
        transcendentals=0,
        bytes_accessed=int(N * HW * itemsize * (1 + K + (2 if h_tiled else 0))),
    )

    if h_tiled:
        # TODO(synk): halo-only neighbour blocks (r rows instead of full prev/next tiles) would
        # cut the tiled-path input traffic from ~3x to ~1x when W is a multiple of 128.
        grid = (num_n, num_h)
        in_specs = [
            pl.BlockSpec((1, TL), lambda n, h: (0, 0)),
            pl.BlockSpec((Nb, TL), lambda n, h: (n, h)),
            pl.BlockSpec((Nb, TL), lambda n, h: (n, jnp.maximum(h - 1, 0))),
            pl.BlockSpec((Nb, TL), lambda n, h: (n, jnp.minimum(h + 1, num_h - 1))),
        ]
        out_specs = pl.BlockSpec((Nb, K, TL), lambda n, h: (n, 0, h))
        operands = (col_map, xf, xf, xf)
        semantics = ("parallel", "parallel")
    else:
        grid = (num_n,)
        in_specs = [
            pl.BlockSpec((1, TL), lambda n: (0, 0)),
            pl.BlockSpec((Nb, TL), lambda n: (n, 0)),
        ]
        out_specs = pl.BlockSpec((Nb, K, TL), lambda n: (n, 0, 0))
        operands = (col_map, xf)
        semantics = ("parallel",)

    out = pl.pallas_call(
        kern,
        out_shape=jax.ShapeDtypeStruct((N, K, HW), x.dtype),
        grid=grid,
        in_specs=in_specs,
        out_specs=out_specs,
        compiler_params=pltpu.CompilerParams(dimension_semantics=semantics,
                                             vmem_limit_bytes=vmem_limit),
        cost_estimate=cost,
    )(*operands)

    return out.reshape(B, C, K, H, W)


# ---------------- reference (plain JAX/XLA) for correctness check ---------------------------
def spatial_gradient_ref(x, mode="sobel", order=1, normalized=True):
    B, C, H, W = x.shape
    k = get_spatial_gradient_kernel2d(mode, order).astype(np.float32)
    if normalized:
        k = k / np.abs(k).sum(axis=(-2, -1), keepdims=True)
    K, kh, kw = k.shape
    ph, pw = kh // 2, kw // 2
    xf = x.reshape(B * C, 1, H, W)
    xp = jnp.pad(xf, ((0, 0), (0, 0), (ph, ph), (pw, pw)), mode="edge")
    w = jnp.asarray(k, x.dtype)[:, None]   # (K, 1, kh, kw); the torch module's flip is a no-op
    out = lax.conv_general_dilated(
        xp, w, window_strides=(1, 1), padding="VALID",
        dimension_numbers=("NCHW", "OIHW", "NCHW"))
    return out.reshape(B, C, K, H, W)


if __name__ == "__main__":
    key = jax.random.PRNGKey(0)
    B, C, H, W = 2, 4, 16, 16
    x = jax.random.normal(key, (B, C, H, W), dtype=jnp.float32)

    # default path: sobel, order=1, normalized=True, whole-image lane-dense blocks
    out = jax.block_until_ready(spatial_gradient(x))
    ref = jax.block_until_ready(spatial_gradient_ref(x))
    assert out.shape == (B, C, 2, H, W), out.shape
    assert np.allclose(np.asarray(out), np.asarray(ref), atol=1e-5, rtol=1e-5)

    # second-order path (3 maps, 5x5 separable taps)
    out2 = jax.block_until_ready(spatial_gradient(x, mode="sobel", order=2))
    ref2 = jax.block_until_ready(spatial_gradient_ref(x, mode="sobel", order=2))
    assert out2.shape == (B, C, 3, H, W), out2.shape
    assert np.allclose(np.asarray(out2), np.asarray(ref2), atol=1e-5, rtol=1e-5)

    # forced H-tiled halo path (the large-image / v7x 64 MiB VMEM code path, on a small shape)
    xb = jax.random.normal(jax.random.PRNGKey(1), (1, 2, 32, 128), dtype=jnp.float32)
    out3 = jax.block_until_ready(spatial_gradient(xb, h_tile=8))
    ref3 = jax.block_until_ready(spatial_gradient_ref(xb))
    assert out3.shape == (1, 2, 2, 32, 128), out3.shape
    assert np.allclose(np.asarray(out3), np.asarray(ref3), atol=1e-5, rtol=1e-5)

    print("KERNEL_OK")
</pallas_src>

<mosaic_0001>
module attributes {stable_mosaic.version = 11 : i64} {
  func.func @_spatial_gradient_kernel(%arg0: i32, %arg1: memref<1x256xi32, #tpu.memory_space<vmem>>, %arg2: memref<8x256xf32, #tpu.memory_space<vmem>>, %arg3: memref<8x2x256xf32, #tpu.memory_space<vmem>>) attributes {dimension_semantics = [#tpu.dimension_semantics<parallel>], iteration_bounds = array<i64: 1>, scalar_prefetch = 0 : i64, scratch_operands = 0 : i64, tpu.core_type = #tpu.core_type<tc>, window_params = [{pipeline_mode = #tpu.pipeline_mode<synchronous>, transform_indices = @transform_0, window_bounds = array<i64: 1, 256>}, {transform_indices = @transform_1, window_bounds = array<i64: 8, 256>}, {transform_indices = @transform_2, window_bounds = array<i64: 8, 2, 256>}]} {
    %c0 = arith.constant 0 : index
    %c0_0 = arith.constant 0 : index
    %0 = vector.load %arg2[%c0, %c0_0] : memref<8x256xf32, #tpu.memory_space<vmem>>, vector<8x256xf32>
    %1 = tpu.iota {dimensions = array<i32: 1>} : vector<1x256xi32>
    %c0_1 = arith.constant 0 : index
    %c0_2 = arith.constant 0 : index
    %2 = vector.load %arg1[%c0_1, %c0_2] : memref<1x256xi32, #tpu.memory_space<vmem>>, vector<1x256xi32>
    %c16_i32 = arith.constant 16 : i32
    %3 = vector.broadcast %c16_i32 : i32 to vector<1x256xi32>
    %4 = arith.cmpi slt, %1, %3 : vector<1x256xi32>
    %c240_i32 = arith.constant 240 : i32
    %5 = vector.broadcast %c240_i32 : i32 to vector<1x256xi32>
    %6 = arith.cmpi sge, %1, %5 : vector<1x256xi32>
    %c1_i32 = arith.constant 1 : i32
    %7 = vector.broadcast %c1_i32 : i32 to vector<1x256xi32>
    %8 = arith.cmpi slt, %2, %7 : vector<1x256xi32>
    %c15_i32 = arith.constant 15 : i32
    %9 = vector.broadcast %c15_i32 : i32 to vector<1x256xi32>
    %10 = arith.cmpi sge, %2, %9 : vector<1x256xi32>
    %c16_i32_3 = arith.constant 16 : i32
    %11 = tpu.dynamic_rotate %0 by %c16_i32_3 dim 1 : vector<8x256xf32>, i32 -> vector<8x256xf32>
    %12 = vector.shape_cast %4 : vector<1x256xi1> to vector<1x256xi1>
    %13 = vector.broadcast %12 : vector<1x256xi1> to vector<8x256xi1>
    %14 = arith.select %13, %0, %11 : vector<8x256xi1>, vector<8x256xf32>
    %cst = arith.constant 2.000000e+00 : f32
    %15 = vector.broadcast %cst : f32 to vector<8x256xf32>
    %16 = arith.mulf %15, %0 : vector<8x256xf32>
    %17 = arith.addf %14, %16 : vector<8x256xf32>
    %c240_i32_4 = arith.constant 240 : i32
    %18 = tpu.dynamic_rotate %0 by %c240_i32_4 dim 1 : vector<8x256xf32>, i32 -> vector<8x256xf32>
    %19 = vector.shape_cast %6 : vector<1x256xi1> to vector<1x256xi1>
    %20 = vector.broadcast %19 : vector<1x256xi1> to vector<8x256xi1>
    %21 = arith.select %20, %0, %18 : vector<8x256xi1>, vector<8x256xf32>
    %22 = arith.addf %17, %21 : vector<8x256xf32>
    %c1_i32_5 = arith.constant 1 : i32
    %23 = tpu.dynamic_rotate %22 by %c1_i32_5 dim 1 : vector<8x256xf32>, i32 -> vector<8x256xf32>
    %24 = vector.shape_cast %8 : vector<1x256xi1> to vector<1x256xi1>
    %25 = vector.broadcast %24 : vector<1x256xi1> to vector<8x256xi1>
    %26 = arith.select %25, %22, %23 : vector<8x256xi1>, vector<8x256xf32>
    %cst_6 = arith.constant -1.000000e+00 : f32
    %27 = vector.broadcast %cst_6 : f32 to vector<8x256xf32>
    %28 = arith.mulf %27, %26 : vector<8x256xf32>
    %c255_i32 = arith.constant 255 : i32
    %29 = tpu.dynamic_rotate %22 by %c255_i32 dim 1 : vector<8x256xf32>, i32 -> vector<8x256xf32>
    %30 = vector.shape_cast %10 : vector<1x256xi1> to vector<1x256xi1>
    %31 = vector.broadcast %30 : vector<1x256xi1> to vector<8x256xi1>
    %32 = arith.select %31, %22, %29 : vector<8x256xi1>, vector<8x256xf32>
    %33 = arith.addf %28, %32 : vector<8x256xf32>
    %cst_7 = arith.constant 1.250000e-01 : f32
    %34 = vector.broadcast %cst_7 : f32 to vector<8x256xf32>
    %35 = arith.mulf %33, %34 : vector<8x256xf32>
    %c0_8 = arith.constant 0 : index
    %c0_9 = arith.constant 0 : index
    %c0_10 = arith.constant 0 : index
    %36 = vector.load %arg3[%c0_8, %c0_9, %c0_10] : memref<8x2x256xf32, #tpu.memory_space<vmem>>, vector<8x1x256xf32>
    %37 = vector.shape_cast %36 : vector<8x1x256xf32> to vector<8x256xf32>
    %38 = vector.shape_cast %35 : vector<8x256xf32> to vector<8x1x256xf32>
    tpu.vector_store %arg3[%c0_8, %c0_9, %c0_10], %38 {strides = array<i32>} : memref<8x2x256xf32, #tpu.memory_space<vmem>>, vector<8x1x256xf32>,
    %cst_11 = arith.constant -1.000000e+00 : f32
    %39 = vector.broadcast %cst_11 : f32 to vector<8x256xf32>
    %40 = arith.mulf %39, %14 : vector<8x256xf32>
    %41 = arith.addf %40, %21 : vector<8x256xf32>
    %c1_i32_12 = arith.constant 1 : i32
    %42 = tpu.dynamic_rotate %41 by %c1_i32_12 dim 1 : vector<8x256xf32>, i32 -> vector<8x256xf32>
    %43 = vector.shape_cast %8 : vector<1x256xi1> to vector<1x256xi1>
    %44 = vector.broadcast %43 : vector<1x256xi1> to vector<8x256xi1>
    %45 = arith.select %44, %41, %42 : vector<8x256xi1>, vector<8x256xf32>
    %cst_13 = arith.constant 2.000000e+00 : f32
    %46 = vector.broadcast %cst_13 : f32 to vector<8x256xf32>
    %47 = arith.mulf %46, %41 : vector<8x256xf32>
    %48 = arith.addf %45, %47 : vector<8x256xf32>
    %c255_i32_14 = arith.constant 255 : i32
    %49 = tpu.dynamic_rotate %41 by %c255_i32_14 dim 1 : vector<8x256xf32>, i32 -> vector<8x256xf32>
    %50 = vector.shape_cast %10 : vector<1x256xi1> to vector<1x256xi1>
    %51 = vector.broadcast %50 : vector<1x256xi1> to vector<8x256xi1>
    %52 = arith.select %51, %41, %49 : vector<8x256xi1>, vector<8x256xf32>
    %53 = arith.addf %48, %52 : vector<8x256xf32>
    %cst_15 = arith.constant 1.250000e-01 : f32
    %54 = vector.broadcast %cst_15 : f32 to vector<8x256xf32>
    %55 = arith.mulf %53, %54 : vector<8x256xf32>
    %c0_16 = arith.constant 0 : index
    %c1 = arith.constant 1 : index
    %c0_17 = arith.constant 0 : index
    %56 = vector.load %arg3[%c0_16, %c1, %c0_17] : memref<8x2x256xf32, #tpu.memory_space<vmem>>, vector<8x1x256xf32>
    %57 = vector.shape_cast %56 : vector<8x1x256xf32> to vector<8x256xf32>
    %58 = vector.shape_cast %55 : vector<8x256xf32> to vector<8x1x256xf32>
    tpu.vector_store %arg3[%c0_16, %c1, %c0_17], %58 {strides = array<i32>} : memref<8x2x256xf32, #tpu.memory_space<vmem>>, vector<8x1x256xf32>,
    return
  }
  func.func @transform_0(%arg0: i32) -> (i32, i32) {
    %c0_i32 = arith.constant 0 : i32
    %c0_i32_0 = arith.constant 0 : i32
    %c0_i32_1 = arith.constant 0 : i32
    return %c0_i32, %c0_i32_0 : i32, i32
  }
  func.func @transform_1(%arg0: i32) -> (i32, i32) {
    %c0_i32 = arith.constant 0 : i32
    %c0_i32_0 = arith.constant 0 : i32
    return %arg0, %c0_i32 : i32, i32
  }
  func.func @transform_2(%arg0: i32) -> (i32, i32, i32) {
    %c0_i32 = arith.constant 0 : i32
    %c0_i32_0 = arith.constant 0 : i32
    %c0_i32_1 = arith.constant 0 : i32
    return %arg0, %c0_i32, %c0_i32_0 : i32, i32, i32
  }
}

</mosaic_0001>

<llo_original>
// kernel: tpu_custom_call.1
$region0: #{tpu_custom_call.1}
  #allocation0 [shape = 'u32[]', space=smem, size = 0x4, offset = 0x4, fixed_abs, tag = 'smem constant byte address 0x4 - core index']
  #allocation1 [shape = 'u32[144,128]{1,0:T(1,128)}', space=vmem, size = 0x12000, scoped, tag = 'internal scratch']
  %s0 = inlined_call_operand.hbm [shape: s32[1,256], index: 0, kind: input, shape index: {}]
  %s1 = inlined_call_operand.hbm [shape: f32[8,256], index: 1, kind: input, shape index: {}]
  %s2 = inlined_call_operand.hbm [shape: f32[8,2,256], index: 2, kind: output, shape index: {}]
  %s3 = sld [smem:[#allocation0]]
  $region26: #{tpu_custom_call.1} parent=0
    _
  %s5 = ssub.s32 1, %s3
  %s6 = scalar_select 0, %s5, %s3
  $region1: #{tpu_custom_call.1} parent=0
    #allocation2 [shape = 'u8[1024]{0}', space=vmem, size = 0x400, scoped, tag = 'input window, operand 0, single buffered']
    #allocation3 [shape = 's32[1]{0}', space=sflag, size = 0x4, scoped, tag = 'scoped memory for tpu_custom_call.1']
    #allocation4 [shape = 's32[1]{0}', space=sflag, size = 0x4, scoped, tag = 'scoped memory for tpu_custom_call.1']
    #allocation5 [shape = 'u8[8192]{0}', space=vmem, size = 0x2000, scoped, tag = 'input window, operand 1, single buffered']
    #allocation6 [shape = 's32[1]{0}', space=sflag, size = 0x4, scoped, tag = 'scoped memory for tpu_custom_call.1']
    #allocation7 [shape = 'u8[16384]{0}', space=vmem, size = 0x4000, scoped, tag = 'output window, operand 0, single buffered']
    %7 = vsyncpa [#allocation3], 0
    %8 = vsyncpa [#allocation6], 0
    %9 = vsyncpa [#allocation4], 0
    // Predicated region
    $region2: #{tpu_custom_call.1} parent=1 // pred_check
      _
    $region3: #{tpu_custom_call.1} parent=1 // pred_check_branch
      %11 = sbr.rel (0) target = $region5
    $region4: #{tpu_custom_call.1} parent=1 // pred_region
      %s13 = ssub.s32 32, 32
      %14 = vsyncadd [#allocation3], %s13
      %s16 = sshll.u32 [#allocation2], 4
      %s17 = int_to_ptr.vmem [resolvable:$true] %s16
      %19 = dma.hbm_to_vmem [thread:$0]  %s0, 32, %s17, [#allocation3]
    $region5: #{tpu_custom_call.1} parent=1 // pred_fallthru
      _
    // Predicated region
    $region6: #{tpu_custom_call.1} parent=1 // pred_check
      _
    $region7: #{tpu_custom_call.1} parent=1 // pred_check_branch
      %21 = sbr.rel (0) target = $region9
    $region8: #{tpu_custom_call.1} parent=1 // pred_region
      %s23 = ssub.s32 256, 256
      %24 = vsyncadd [#allocation6], %s23
      %s26 = sshll.u32 [#allocation5], 4
      %s27 = int_to_ptr.vmem [resolvable:$true] %s26
      %29 = dma.hbm_to_vmem [thread:$0]  %s1, 256, %s27, [#allocation6]
    $region9: #{tpu_custom_call.1} parent=1 // pred_fallthru
      _
    // Predicated region
    $region10: #{tpu_custom_call.1} parent=1 // pred_check
      _
    $region11: #{tpu_custom_call.1} parent=1 // pred_check_branch
      %31 = sbr.rel (0) target = $region13
    $region12: #{tpu_custom_call.1} parent=1 // pred_region
      %32 = dma.done [#allocation3], 32
    $region13: #{tpu_custom_call.1} parent=1 // pred_fallthru
      _
    // Predicated region
    $region14: #{tpu_custom_call.1} parent=1 // pred_check
      _
    $region15: #{tpu_custom_call.1} parent=1 // pred_check_branch
      %34 = sbr.rel (0) target = $region17
    $region16: #{tpu_custom_call.1} parent=1 // pred_region
      %35 = dma.done [#allocation6], 256
    $region17: #{tpu_custom_call.1} parent=1 // pred_fallthru
      _
    %v36 = vld [vmem:[#allocation5] sm:$0xff]
    %v37 = vld [vmem:[#allocation5 + $0x8] sm:$0xff]
    %v38 = vlaneseq
    %v39 = vand.u32 %v38, 127
    %v40 = vadd.s32 %v39, 128
    %v41 = vld [vmem:[#allocation2] sm:$0x3]
    %vm42 = vcmp.lt.s32.totalorder %v39, 16
    %vm43 = vcmp.lt.s32.totalorder %v40, 16
    %vm44 = vcmp.ge.s32.totalorder %v39, 240
    %vm45 = vcmp.ge.s32.totalorder %v40, 240
    %vm46 = vcmp.lt.s32.totalorder %v41, 1
    %vm47 = vcmp.ge.s32.totalorder %v41, 15
    %48 = vrot.lane.b32.xlu0 %v36, 16
    %v49 = vpop.permute.xlu0 %48
    %50 = vrot.lane.b32.xlu0 %v37, 16
    %v51 = vpop.permute.xlu0 %50
    %v52 = vsel %vm42, %v49, %v51
    %v53 = vsel %vm42, %v51, %v49
    %v54 = vsel %vm42, 1, 0
    %v55 = vsel %vm43, 1, 0
    %vm56 = vcmp.eq.s32.totalorder %v54, 1
    %vm57 = vcmp.eq.s32.totalorder %v55, 1
    %v58 = vsel %vm56, %v36, %v53
    %v59 = vsel %vm57, %v37, %v52
    %v60 = vmul.f32 %v36, 2.0
    %v61 = vmul.f32 %v37, 2.0
    %v62 = vadd.f32 %v58, %v60
    %v63 = vadd.f32 %v59, %v61
    %64 = vrot.lane.b32.xlu0 %v36, 112
    %v65 = vpop.permute.xlu0 %64
    %66 = vrot.lane.b32.xlu0 %v37, 112
    %v67 = vpop.permute.xlu0 %66
    %vm68 = vcmp.lt.s32.totalorder %v39, 112
    %v69 = vsel %vm68, %v65, %v67
    %v70 = vsel %vm68, %v67, %v65
    %v71 = vsel %vm44, 1, 0
    %v72 = vsel %vm45, 1, 0
    %vm73 = vcmp.eq.s32.totalorder %v71, 1
    %vm74 = vcmp.eq.s32.totalorder %v72, 1
    %v75 = vsel %vm73, %v36, %v69
    %v76 = vsel %vm74, %v37, %v70
    %v77 = vadd.f32 %v62, %v75
    %v78 = vadd.f32 %v63, %v76
    %79 = vrot.lane.b32.xlu0 %v77, 1
    %v80 = vpop.permute.xlu0 %79
    %81 = vrot.lane.b32.xlu0 %v78, 1
    %v82 = vpop.permute.xlu0 %81
    %vm83 = vcmp.lt.s32.totalorder %v39, 1
    %v84 = vsel %vm83, %v80, %v82
    %v85 = vsel %vm83, %v82, %v80
    %v86 = vsel %vm46, 1, 0
    %v87 = vlaneseq
    %v88 = vshrl.u32 %v87, 7
    %v89 = vsub.s32 0, %v88
    %v90 = vrot.slane %v86, %v89
    %v91 = vlaneseq
    %v92 = vshrl.u32 %v91, 7
    %v93 = vsub.s32 1, %v92
    %v94 = vrot.slane %v86, %v93
    %vm95 = vcmp.eq.s32.totalorder %v90, 1
    %vm96 = vcmp.eq.s32.totalorder %v94, 1
    %v97 = vsel %vm95, %v77, %v85
    %v98 = vsel %vm96, %v78, %v84
    %v99 = vmul.f32 %v97, -1.0
    %v100 = vmul.f32 %v98, -1.0
    %101 = vrot.lane.b32.xlu0 %v77, 127
    %v102 = vpop.permute.xlu0 %101
    %103 = vrot.lane.b32.xlu0 %v78, 127
    %v104 = vpop.permute.xlu0 %103
    %vm105 = vcmp.lt.s32.totalorder %v39, 127
    %v106 = vsel %vm105, %v102, %v104
    %v107 = vsel %vm105, %v104, %v102
    %v108 = vsel %vm47, 1, 0
    %v109 = vlaneseq
    %v110 = vshrl.u32 %v109, 7
    %v111 = vsub.s32 0, %v110
    %v112 = vrot.slane %v108, %v111
    %v113 = vlaneseq
    %v114 = vshrl.u32 %v113, 7
    %v115 = vsub.s32 1, %v114
    %v116 = vrot.slane %v108, %v115
    %vm117 = vcmp.eq.s32.totalorder %v112, 1
    %vm118 = vcmp.eq.s32.totalorder %v116, 1
    %v119 = vsel %vm117, %v77, %v106
    %v120 = vsel %vm118, %v78, %v107
    %v121 = vadd.f32 %v99, %v119
    %v122 = vadd.f32 %v100, %v120
    %v123 = vmul.f32 %v121, 0.125
    %v124 = vmul.f32 %v122, 0.125
    %v127 = vcombine.low %v123, %v124
    %v128 = vcombine.high %v123, %v124
    %v130 = vunpack.c.l.s4 1966171168
    %v131 = vunpack.c.0.s8 %v130
    %v132 = vlaneseq
    %v133 = vshrl.u32 %v132, 7
    %v134 = vsub.s32 %v131, %v133
    %v135 = vrot.slane %v127, %v134
    %v137 = vunpack.c.l.s4 1966171168
    %v138 = vunpack.c.0.s8 %v137
    %v139 = vlaneseq
    %v140 = vshrl.u32 %v139, 7
    %v141 = vsub.s32 %v138, %v140
    %v142 = vrot.slane %v128, %v141
    %v143 = vcombine.high %v135, %v135
    %v144 = vcombine.high %v142, %v142
    %v146 = vunpack.c.l.s4 1966171168
    %v147 = vunpack.c.0.s8 %v146
    %v148 = vlaneseq
    %v149 = vshrl.u32 %v148, 7
    %v150 = vsub.s32 %v147, %v149
    %v151 = vrot.slane %v135, %v150
    %v153 = vunpack.c.l.s4 1966171168
    %v154 = vunpack.c.0.s8 %v153
    %v155 = vlaneseq
    %v156 = vshrl.u32 %v155, 7
    %v157 = vsub.s32 %v154, %v156
    %v158 = vrot.slane %v142, %v157
    %v160 = vunpack.c.l.s4 1966171168
    %v161 = vunpack.c.0.s8 %v160
    %v162 = vlaneseq
    %v163 = vshrl.u32 %v162, 7
    %v164 = vsub.s32 %v161, %v163
    %v165 = vrot.slane %v143, %v164
    %v167 = vunpack.c.l.s4 1966171168
    %v168 = vunpack.c.0.s8 %v167
    %v169 = vlaneseq
    %v170 = vshrl.u32 %v169, 7
    %v171 = vsub.s32 %v168, %v170
    %v172 = vrot.slane %v144, %v171
    %v173 = vcombine.high %v151, %v151
    %v174 = vcombine.high %v158, %v158
    %v175 = vcombine.high %v165, %v165
    %v176 = vcombine.high %v172, %v172
    %v185 = vlaneseq
    %vm186 = vcmp.ge.s32.totalorder %v185, 0
    %vm187 = vcmp.lt.s32.totalorder %v185, 256
    %vm188 = vmand %vm186, %vm187
    %189 = vst.msk [vmem:[#allocation7] ss:$2 sm:$0x3] %vm188, %v151
    %s190 = scalar_lea.vmem [#allocation7], 4
    %191 = vst.msk [vmem:[%s190] ss:$2 sm:$0x3] %vm188, %v165
    %s192 = scalar_lea.vmem [#allocation7], 8
    %193 = vst.msk [vmem:[%s192] ss:$2 sm:$0x3] %vm188, %v173
    %s194 = scalar_lea.vmem [#allocation7], 12
    %195 = vst.msk [vmem:[%s194] ss:$2 sm:$0x3] %vm188, %v175
    %s196 = scalar_lea.vmem [#allocation7], 16
    %197 = vst.msk [vmem:[%s196] ss:$2 sm:$0x3] %vm188, %v158
    %s198 = scalar_lea.vmem [#allocation7], 20
    %199 = vst.msk [vmem:[%s198] ss:$2 sm:$0x3] %vm188, %v172
    %s200 = scalar_lea.vmem [#allocation7], 24
    %201 = vst.msk [vmem:[%s200] ss:$2 sm:$0x3] %vm188, %v174
    %s202 = scalar_lea.vmem [#allocation7], 28
    %203 = vst.msk [vmem:[%s202] ss:$2 sm:$0x3] %vm188, %v176
    %v204 = vmul.f32 %v58, -1.0
    %v205 = vmul.f32 %v59, -1.0
    %v206 = vadd.f32 %v204, %v75
    %v207 = vadd.f32 %v205, %v76
    %208 = vrot.lane.b32.xlu0 %v206, 1
    %v209 = vpop.permute.xlu0 %208
    %210 = vrot.lane.b32.xlu0 %v207, 1
    %v211 = vpop.permute.xlu0 %210
    %v212 = vsel %vm83, %v209, %v211
    %v213 = vsel %vm83, %v211, %v209
    %v214 = vsel %vm95, %v206, %v213
    %v215 = vsel %vm96, %v207, %v212
    %v216 = vmul.f32 %v206, 2.0
    %v217 = vmul.f32 %v207, 2.0
    %v218 = vadd.f32 %v214, %v216
    %v219 = vadd.f32 %v215, %v217
    %220 = vrot.lane.b32.xlu0 %v206, 127
    %v221 = vpop.permute.xlu0 %220
    %222 = vrot.lane.b32.xlu0 %v207, 127
    %v223 = vpop.permute.xlu0 %222
    %v224 = vsel %vm105, %v221, %v223
    %v225 = vsel %vm105, %v223, %v221
    %v226 = vsel %vm117, %v206, %v224
    %v227 = vsel %vm118, %v207, %v225
    %v228 = vadd.f32 %v218, %v226
    %v229 = vadd.f32 %v219, %v227
    %v230 = vmul.f32 %v228, 0.125
    %v231 = vmul.f32 %v229, 0.125
    %v234 = vcombine.low %v230, %v231
    %v235 = vcombine.high %v230, %v231
    %v237 = vunpack.c.l.s4 1966171168
    %v238 = vunpack.c.0.s8 %v237
    %v239 = vlaneseq
    %v240 = vshrl.u32 %v239, 7
    %v241 = vsub.s32 %v238, %v240
    %v242 = vrot.slane %v234, %v241
    %v244 = vunpack.c.l.s4 1966171168
    %v245 = vunpack.c.0.s8 %v244
    %v246 = vlaneseq
    %v247 = vshrl.u32 %v246, 7
    %v248 = vsub.s32 %v245, %v247
    %v249 = vrot.slane %v235, %v248
    %v250 = vcombine.high %v242, %v242
    %v251 = vcombine.high %v249, %v249
    %v253 = vunpack.c.l.s4 1966171168
    %v254 = vunpack.c.0.s8 %v253
    %v255 = vlaneseq
    %v256 = vshrl.u32 %v255, 7
    %v257 = vsub.s32 %v254, %v256
    %v258 = vrot.slane %v242, %v257
    %v260 = vunpack.c.l.s4 1966171168
    %v261 = vunpack.c.0.s8 %v260
    %v262 = vlaneseq
    %v263 = vshrl.u32 %v262, 7
    %v264 = vsub.s32 %v261, %v263
    %v265 = vrot.slane %v249, %v264
    %v267 = vunpack.c.l.s4 1966171168
    %v268 = vunpack.c.0.s8 %v267
    %v269 = vlaneseq
    %v270 = vshrl.u32 %v269, 7
    %v271 = vsub.s32 %v268, %v270
    %v272 = vrot.slane %v250, %v271
    %v274 = vunpack.c.l.s4 1966171168
    %v275 = vunpack.c.0.s8 %v274
    %v276 = vlaneseq
    %v277 = vshrl.u32 %v276, 7
    %v278 = vsub.s32 %v275, %v277
    %v279 = vrot.slane %v251, %v278
    %v280 = vcombine.high %v258, %v258
    %v281 = vcombine.high %v265, %v265
    %v282 = vcombine.high %v272, %v272
    %v283 = vcombine.high %v279, %v279
    %s292 = scalar_lea.vmem [#allocation7], 1
    %293 = vst.msk [vmem:[%s292] ss:$2 sm:$0x3] %vm188, %v258
    %s294 = scalar_lea.vmem [#allocation7], 5
    %295 = vst.msk [vmem:[%s294] ss:$2 sm:$0x3] %vm188, %v272
    %s296 = scalar_lea.vmem [#allocation7], 9
    %297 = vst.msk [vmem:[%s296] ss:$2 sm:$0x3] %vm188, %v280
    %s298 = scalar_lea.vmem [#allocation7], 13
    %299 = vst.msk [vmem:[%s298] ss:$2 sm:$0x3] %vm188, %v282
    %s300 = scalar_lea.vmem [#allocation7], 17
    %301 = vst.msk [vmem:[%s300] ss:$2 sm:$0x3] %vm188, %v265
    %s302 = scalar_lea.vmem [#allocation7], 21
    %303 = vst.msk [vmem:[%s302] ss:$2 sm:$0x3] %vm188, %v279
    %s304 = scalar_lea.vmem [#allocation7], 25
    %305 = vst.msk [vmem:[%s304] ss:$2 sm:$0x3] %vm188, %v281
    %s306 = scalar_lea.vmem [#allocation7], 29
    %307 = vst.msk [vmem:[%s306] ss:$2 sm:$0x3] %vm188, %v283
    // Predicated region
    $region18: #{tpu_custom_call.1} parent=1 // pred_check
      _
    $region19: #{tpu_custom_call.1} parent=1 // pred_check_branch
      %309 = sbr.rel (0) target = $region21
    $region20: #{tpu_custom_call.1} parent=1 // pred_region
      %s311 = ssub.s32 512, 512
      %312 = vsyncadd [#allocation4], %s311
      %s313 = sshll.u32 [#allocation7], 4
      %s314 = int_to_ptr.vmem [resolvable:$true] %s313
      %319 = dma.vmem_to_hbm [thread:$0]  %s314, 512, %s2, [#allocation4], 64, 64, 4
    $region21: #{tpu_custom_call.1} parent=1 // pred_fallthru
      _
    // Predicated region
    $region22: #{tpu_custom_call.1} parent=1 // pred_check
      _
    $region23: #{tpu_custom_call.1} parent=1 // pred_check_branch
      %321 = sbr.rel (0) target = $region25
    $region24: #{tpu_custom_call.1} parent=1 // pred_region
      %322 = dma.done [#allocation4], 512
    $region25: #{tpu_custom_call.1} parent=1 // pred_fallthru
      _
    %323 = vsyncpa [#allocation3], 1
    %324 = vsyncpa [#allocation6], 1
    %325 = vsyncpa [#allocation4], 1

</llo_original>
